<compile_context>
chip_gen: v5e
topology: v5e:2x2
jax: 0.10.0
libtpu: 0.0.40
codegen_flags: <defaults>
</compile_context>

<pallas_src>
import numpy as np
import jax
import jax.numpy as jnp
from jax.experimental import pallas as pl
from jax.experimental.pallas import tpu as pltpu

LANE = 128
SUBLANE = 8
NEG_BIG = -1e30


def _round_up(n, m):
    return (n + m - 1) // m * m


def _make_kernel(TB, K_max, T_pad, F_pad):
    def kernel(x_ref, w_ref, b_ref, mask_ref, o_ref):
        x = x_ref[...]                               # (TB, S_need, C)
        w = w_ref[...]                               # (K_max, C, F_pad)
        # Fused conv for ALL branches: K_max tap-matmuls contracting over C,
        # accumulated in f32.  MXU N dim is the shared lane-dense F_pad.
        acc = jnp.zeros((TB * T_pad, F_pad), jnp.float32)
        for j in range(K_max):                       # static unroll, K_max small
            xj = x[:, j:j + T_pad, :]                # (TB, T_pad, C) sublane shift
            xj = xj.reshape(TB * T_pad, -1)          # tile-aligned: T_pad % 8 == 0
            acc = acc + jnp.dot(xj, w[j], preferred_element_type=jnp.float32)
        # Mask time positions that are invalid for shorter-K branches (they read
        # zero-padded input), then global max-pool over time.
        y = acc.reshape(TB, T_pad, F_pad) + mask_ref[...][None, :, :]
        m = jnp.max(y, axis=1)                       # (TB, F_pad)
        # Bias is time-invariant -> adding it AFTER the max is exact.
        o_ref[...] = (m + b_ref[...]).astype(o_ref.dtype)
    return kernel


def cnn_extractor_forward(input_data, params, *, compute_dtype=jnp.float32):
    """Fused cnn_extractor forward.

    input_data: (B, S, C_in) f32 (same tensor the PyTorch module receives)
    params: list of (w, b); w: (K, C_in, F) [= PyTorch (F, C_in, K) transposed],
            b: (1, F)
    compute_dtype: operand dtype for the conv matmuls (f32 exact, bf16 fast on
                   v6e/v7x); accumulation is always f32.
    returns: (B, sum F) f32
    """
    B, S, C = input_data.shape
    branch_meta = []
    for (w, b) in params:
        K, Cw, F = w.shape
        assert Cw == C, "channel mismatch"
        assert 1 <= K <= S, f"kernel size {K} must be in [1, seq_len={S}]"
        branch_meta.append((K, F))

    K_max = max(k for k, _ in branch_meta)
    K_min = min(k for k, _ in branch_meta)
    sum_f = sum(f for _, f in branch_meta)
    F_pad = max(LANE, _round_up(sum_f, LANE))
    T_max = S - K_min + 1                      # longest branch output length
    T_pad = _round_up(T_max, SUBLANE)          # sublane-aligned time extent
    S_need = T_pad + K_max - 1                 # x time length after zero padding

    # --- combined weight / bias / validity mask (branch fusion) -------------
    w_comb = jnp.zeros((K_max, C, F_pad), compute_dtype)
    b_comb = jnp.zeros((1, F_pad), jnp.float32)
    t_lim = np.full((F_pad,), T_max, np.int32)
    col = 0
    for (w, b), (K, F) in zip(params, branch_meta):
        w_comb = w_comb.at[:K, :, col:col + F].set(w.astype(compute_dtype))
        b_comb = b_comb.at[:, col:col + F].set(b.astype(jnp.float32))
        t_lim[col:col + F] = S - K + 1         # valid output length per branch
        col += F
    mask_np = np.where(np.arange(T_pad)[:, None] < t_lim[None, :], 0.0, NEG_BIG)
    mask = jnp.asarray(mask_np, jnp.float32)   # (T_pad, F_pad)

    # --- batch tile sized against VMEM (v7x 64 MiB, v5e scoped default 16 MiB)
    itemsize = np.dtype(compute_dtype).itemsize
    per_row = (2 * S_need * C * itemsize       # x block, double-buffered
               + T_pad * F_pad * 4             # f32 conv activations
               + 2 * F_pad * 4)                # out block, double-buffered
    TB = max(SUBLANE, int((8 << 20) // max(per_row, 1)) // SUBLANE * SUBLANE)
    TB = min(TB, 512)
    if B > SUBLANE:
        # keep >= 2 grid steps when B allows, so v7x can shard across its 2 TCs
        TB = min(TB, _round_up(_round_up(B, SUBLANE) // 2, SUBLANE))
    TB = min(TB, _round_up(B, SUBLANE))
    B_pad = _round_up(B, TB)

    x = input_data.astype(compute_dtype)
    pad_b, pad_t = B_pad - B, S_need - S
    if pad_b or pad_t:
        x = jnp.pad(x, ((0, pad_b), (0, pad_t), (0, 0)))

    vmem_need = (TB * per_row
                 + K_max * C * F_pad * itemsize         # resident fused weight
                 + (T_pad + 1) * F_pad * 4)             # resident mask + bias
    vmem_limit = int(min(64 << 20, max(4 * vmem_need, 32 << 20)))

    flops = 2 * B_pad * T_pad * K_max * C * F_pad
    bytes_accessed = int(x.size * itemsize + w_comb.size * itemsize
                         + (mask.size + b_comb.size + B_pad * F_pad) * 4)

    kernel = _make_kernel(TB, K_max, T_pad, F_pad)
    out_pad = pl.pallas_call(
        kernel,
        grid=(B_pad // TB,),
        in_specs=[
            pl.BlockSpec((TB, S_need, C), lambda i: (i, 0, 0)),     # x: batch-tiled
            pl.BlockSpec((K_max, C, F_pad), lambda i: (0, 0, 0)),   # weights resident
            pl.BlockSpec((1, F_pad), lambda i: (0, 0)),             # bias resident
            pl.BlockSpec((T_pad, F_pad), lambda i: (0, 0)),         # mask resident
        ],
        out_specs=pl.BlockSpec((TB, F_pad), lambda i: (i, 0)),
        out_shape=jax.ShapeDtypeStruct((B_pad, F_pad), jnp.float32),
        compiler_params=pltpu.CompilerParams(
            dimension_semantics=("parallel",),
            vmem_limit_bytes=vmem_limit),
        cost_estimate=pl.CostEstimate(flops=flops, transcendentals=0,
                                      bytes_accessed=bytes_accessed),
    )(x, w_comb, b_comb, mask)

    # strip batch/lane padding; matches PyTorch .view([-1, sum_F])
    return out_pad[:B, :sum_f].reshape(-1, sum_f)


def _reference_forward(input_data, params):
    """Pure-JAX reference (no Pallas), mirroring the PyTorch module exactly."""
    outs = []
    B, S, C = input_data.shape
    for (w, b) in params:
        K, _, F = w.shape
        T = S - K + 1
        y = jnp.zeros((B, T, F), jnp.float32)
        for j in range(K):
            y = y + jnp.einsum('btc,cf->btf', input_data[:, j:j + T, :], w[j])
        y = y + b[None, :, :]                  # bias before max (identical result)
        outs.append(jnp.max(y, axis=1))
    feature = jnp.concatenate(outs, axis=1)
    return feature.reshape(-1, feature.shape[1])


if __name__ == "__main__":
    # Module config: feature_kernel = {kernel_size: feature_num}
    feature_kernel = {3: 16, 5: 16}
    input_size = 4          # C_in
    batch = 2
    seq = 16

    key = jax.random.PRNGKey(0)
    kx, *kparams = jax.random.split(key, 1 + 2 * len(feature_kernel))

    # Deterministic synthetic parameters (shapes match nn.Conv1d(C_in, F, K)):
    #   PyTorch weight (F, C_in, K)  ->  stored here as (K, C_in, F)
    params = []
    it = iter(kparams)
    for ksize, fnum in feature_kernel.items():
        kw = next(it)
        kb = next(it)
        w = jax.random.normal(kw, (ksize, input_size, fnum), jnp.float32) * 0.1
        b = jax.random.normal(kb, (1, fnum), jnp.float32) * 0.1
        params.append((w, b))

    x = jax.random.normal(kx, (batch, seq, input_size), jnp.float32)

    ref = _reference_forward(x, params)

    # f32 operands: exact parity with the f32 reference.
    out = jax.block_until_ready(cnn_extractor_forward(x, params))
    assert out.shape == (batch, sum(feature_kernel.values()))
    assert jnp.allclose(out, ref, atol=1e-5, rtol=1e-5), "f32 mismatch vs reference"

    # bf16 operands + f32 accumulation (v6e/v7x MXU-native mode); looser tolerance
    # because the time-argmax can flip on bf16-level near-ties.
    out_bf16 = jax.block_until_ready(
        cnn_extractor_forward(x, params, compute_dtype=jnp.bfloat16))
    assert jnp.allclose(out_bf16, ref, atol=5e-2, rtol=5e-2), "bf16 mismatch vs reference"

    print("KERNEL_OK")
</pallas_src>

<mosaic_0001>
module attributes {stable_mosaic.version = 11 : i64} {
  func.func @kernel(%arg0: i32, %arg1: memref<8x20x4xf32, #tpu.memory_space<vmem>>, %arg2: memref<5x4x128xf32, #tpu.memory_space<vmem>>, %arg3: memref<1x128xf32, #tpu.memory_space<vmem>>, %arg4: memref<16x128xf32, #tpu.memory_space<vmem>>, %arg5: memref<8x128xf32, #tpu.memory_space<vmem>>) attributes {dimension_semantics = [#tpu.dimension_semantics<parallel>], iteration_bounds = array<i64: 1>, scalar_prefetch = 0 : i64, scratch_operands = 0 : i64, tpu.core_type = #tpu.core_type<tc>, window_params = [{transform_indices = @transform_0, window_bounds = array<i64: 8, 20, 4>}, {pipeline_mode = #tpu.pipeline_mode<synchronous>, transform_indices = @transform_1, window_bounds = array<i64: 5, 4, 128>}, {pipeline_mode = #tpu.pipeline_mode<synchronous>, transform_indices = @transform_2, window_bounds = array<i64: 1, 128>}, {pipeline_mode = #tpu.pipeline_mode<synchronous>, transform_indices = @transform_3, window_bounds = array<i64: 16, 128>}, {transform_indices = @transform_4, window_bounds = array<i64: 8, 128>}]} {
    %c0 = arith.constant 0 : index
    %c0_0 = arith.constant 0 : index
    %c0_1 = arith.constant 0 : index
    %0 = vector.load %arg1[%c0, %c0_0, %c0_1] : memref<8x20x4xf32, #tpu.memory_space<vmem>>, vector<8x20x4xf32>
    %c0_2 = arith.constant 0 : index
    %c0_3 = arith.constant 0 : index
    %c0_4 = arith.constant 0 : index
    %1 = vector.load %arg2[%c0_2, %c0_3, %c0_4] : memref<5x4x128xf32, #tpu.memory_space<vmem>>, vector<5x4x128xf32>
    %cst = arith.constant 0.000000e+00 : f32
    %2 = vector.broadcast %cst : f32 to vector<128x128xf32>
    %3 = vector.extract_strided_slice %0 {offsets = [0, 0, 0], sizes = [8, 16, 4], strides = [1, 1, 1]} : vector<8x20x4xf32> to vector<8x16x4xf32>
    %4 = vector.shape_cast %3 : vector<8x16x4xf32> to vector<128x4xf32>
    %5 = vector.extract_strided_slice %1 {offsets = [0, 0, 0], sizes = [1, 4, 128], strides = [1, 1, 1]} : vector<5x4x128xf32> to vector<1x4x128xf32>
    %6 = vector.shape_cast %5 : vector<1x4x128xf32> to vector<4x128xf32>
    %cst_5 = arith.constant dense<0.000000e+00> : vector<128x128xf32>
    %7 = tpu.matmul %4, %6, %cst_5 {dimension_numbers = #tpu.dot_dimension_numbers<[1], [0], [0], [1], [0, 0, 1, 1], [], []>} : vector<128x4xf32>, vector<4x128xf32>, vector<128x128xf32> -> vector<128x128xf32>
    %8 = arith.addf %2, %7 : vector<128x128xf32>
    %9 = vector.extract_strided_slice %0 {offsets = [0, 1, 0], sizes = [8, 16, 4], strides = [1, 1, 1]} : vector<8x20x4xf32> to vector<8x16x4xf32>
    %10 = vector.shape_cast %9 : vector<8x16x4xf32> to vector<128x4xf32>
    %11 = vector.extract_strided_slice %1 {offsets = [1, 0, 0], sizes = [1, 4, 128], strides = [1, 1, 1]} : vector<5x4x128xf32> to vector<1x4x128xf32>
    %12 = vector.shape_cast %11 : vector<1x4x128xf32> to vector<4x128xf32>
    %cst_6 = arith.constant dense<0.000000e+00> : vector<128x128xf32>
    %13 = tpu.matmul %10, %12, %cst_6 {dimension_numbers = #tpu.dot_dimension_numbers<[1], [0], [0], [1], [0, 0, 1, 1], [], []>} : vector<128x4xf32>, vector<4x128xf32>, vector<128x128xf32> -> vector<128x128xf32>
    %14 = arith.addf %8, %13 : vector<128x128xf32>
    %15 = vector.extract_strided_slice %0 {offsets = [0, 2, 0], sizes = [8, 16, 4], strides = [1, 1, 1]} : vector<8x20x4xf32> to vector<8x16x4xf32>
    %16 = vector.shape_cast %15 : vector<8x16x4xf32> to vector<128x4xf32>
    %17 = vector.extract_strided_slice %1 {offsets = [2, 0, 0], sizes = [1, 4, 128], strides = [1, 1, 1]} : vector<5x4x128xf32> to vector<1x4x128xf32>
    %18 = vector.shape_cast %17 : vector<1x4x128xf32> to vector<4x128xf32>
    %cst_7 = arith.constant dense<0.000000e+00> : vector<128x128xf32>
    %19 = tpu.matmul %16, %18, %cst_7 {dimension_numbers = #tpu.dot_dimension_numbers<[1], [0], [0], [1], [0, 0, 1, 1], [], []>} : vector<128x4xf32>, vector<4x128xf32>, vector<128x128xf32> -> vector<128x128xf32>
    %20 = arith.addf %14, %19 : vector<128x128xf32>
    %21 = vector.extract_strided_slice %0 {offsets = [0, 3, 0], sizes = [8, 16, 4], strides = [1, 1, 1]} : vector<8x20x4xf32> to vector<8x16x4xf32>
    %22 = vector.shape_cast %21 : vector<8x16x4xf32> to vector<128x4xf32>
    %23 = vector.extract_strided_slice %1 {offsets = [3, 0, 0], sizes = [1, 4, 128], strides = [1, 1, 1]} : vector<5x4x128xf32> to vector<1x4x128xf32>
    %24 = vector.shape_cast %23 : vector<1x4x128xf32> to vector<4x128xf32>
    %cst_8 = arith.constant dense<0.000000e+00> : vector<128x128xf32>
    %25 = tpu.matmul %22, %24, %cst_8 {dimension_numbers = #tpu.dot_dimension_numbers<[1], [0], [0], [1], [0, 0, 1, 1], [], []>} : vector<128x4xf32>, vector<4x128xf32>, vector<128x128xf32> -> vector<128x128xf32>
    %26 = arith.addf %20, %25 : vector<128x128xf32>
    %27 = vector.extract_strided_slice %0 {offsets = [0, 4, 0], sizes = [8, 16, 4], strides = [1, 1, 1]} : vector<8x20x4xf32> to vector<8x16x4xf32>
    %28 = vector.shape_cast %27 : vector<8x16x4xf32> to vector<128x4xf32>
    %29 = vector.extract_strided_slice %1 {offsets = [4, 0, 0], sizes = [1, 4, 128], strides = [1, 1, 1]} : vector<5x4x128xf32> to vector<1x4x128xf32>
    %30 = vector.shape_cast %29 : vector<1x4x128xf32> to vector<4x128xf32>
    %cst_9 = arith.constant dense<0.000000e+00> : vector<128x128xf32>
    %31 = tpu.matmul %28, %30, %cst_9 {dimension_numbers = #tpu.dot_dimension_numbers<[1], [0], [0], [1], [0, 0, 1, 1], [], []>} : vector<128x4xf32>, vector<4x128xf32>, vector<128x128xf32> -> vector<128x128xf32>
    %32 = arith.addf %26, %31 : vector<128x128xf32>
    %33 = vector.shape_cast %32 : vector<128x128xf32> to vector<8x16x128xf32>
    %c0_10 = arith.constant 0 : index
    %c0_11 = arith.constant 0 : index
    %34 = vector.load %arg4[%c0_10, %c0_11] : memref<16x128xf32, #tpu.memory_space<vmem>>, vector<16x128xf32>
    %35 = vector.shape_cast %34 : vector<16x128xf32> to vector<1x16x128xf32>
    %36 = vector.broadcast %35 : vector<1x16x128xf32> to vector<8x16x128xf32>
    %37 = arith.addf %33, %36 : vector<8x16x128xf32>
    %cst_12 = arith.constant dense<0xFF800000> : vector<8x128xf32>
    %38 = vector.multi_reduction <maximumf>, %37, %cst_12 [1] : vector<8x16x128xf32> to vector<8x128xf32>
    %c0_13 = arith.constant 0 : index
    %c0_14 = arith.constant 0 : index
    %39 = vector.load %arg3[%c0_13, %c0_14] : memref<1x128xf32, #tpu.memory_space<vmem>>, vector<1x128xf32>
    %40 = vector.broadcast %39 : vector<1x128xf32> to vector<8x128xf32>
    %41 = arith.addf %38, %40 : vector<8x128xf32>
    %c0_15 = arith.constant 0 : index
    %c0_16 = arith.constant 0 : index
    %42 = vector.load %arg5[%c0_15, %c0_16] : memref<8x128xf32, #tpu.memory_space<vmem>>, vector<8x128xf32>
    tpu.vector_store %arg5[%c0_15, %c0_16], %41 {strides = array<i32>} : memref<8x128xf32, #tpu.memory_space<vmem>>, vector<8x128xf32>,
    return
  }
  func.func @transform_0(%arg0: i32) -> (i32, i32, i32) {
    %c0_i32 = arith.constant 0 : i32
    %c0_i32_0 = arith.constant 0 : i32
    %c0_i32_1 = arith.constant 0 : i32
    return %arg0, %c0_i32, %c0_i32_0 : i32, i32, i32
  }
  func.func @transform_1(%arg0: i32) -> (i32, i32, i32) {
    %c0_i32 = arith.constant 0 : i32
    %c0_i32_0 = arith.constant 0 : i32
    %c0_i32_1 = arith.constant 0 : i32
    %c0_i32_2 = arith.constant 0 : i32
    return %c0_i32, %c0_i32_0, %c0_i32_1 : i32, i32, i32
  }
  func.func @transform_2(%arg0: i32) -> (i32, i32) {
    %c0_i32 = arith.constant 0 : i32
    %c0_i32_0 = arith.constant 0 : i32
    %c0_i32_1 = arith.constant 0 : i32
    return %c0_i32, %c0_i32_0 : i32, i32
  }
  func.func @transform_3(%arg0: i32) -> (i32, i32) {
    %c0_i32 = arith.constant 0 : i32
    %c0_i32_0 = arith.constant 0 : i32
    %c0_i32_1 = arith.constant 0 : i32
    return %c0_i32, %c0_i32_0 : i32, i32
  }
  func.func @transform_4(%arg0: i32) -> (i32, i32) {
    %c0_i32 = arith.constant 0 : i32
    %c0_i32_0 = arith.constant 0 : i32
    return %arg0, %c0_i32 : i32, i32
  }
}

</mosaic_0001>

<llo_original>
// kernel: tpu_custom_call.1
$region0: #{tpu_custom_call.1}
  #allocation0 [shape = 'u32[]', space=smem, size = 0x4, offset = 0x4, fixed_abs, tag = 'smem constant byte address 0x4 - core index']
  #allocation1 [shape = 'u32[72,128]{1,0:T(1,128)}', space=vmem, size = 0x9000, scoped, tag = 'internal scratch']
  %s0 = inlined_call_operand.vmem [shape: f32[8,20,4], index: 0, kind: input, shape index: {}]
  %s1 = inlined_call_operand.vmem [shape: f32[5,4,128], index: 1, kind: input, shape index: {}]
  %s2 = inlined_call_operand.vmem [shape: f32[1,128], index: 2, kind: input, shape index: {}]
  %s3 = inlined_call_operand.vmem [shape: f32[16,128], index: 3, kind: input, shape index: {}]
  %s4 = inlined_call_operand.hbm [shape: f32[8,128], index: 4, kind: output, shape index: {}]
  %s5 = sld [smem:[#allocation0]]
  $region26: #{tpu_custom_call.1} parent=0
    _
  %s7 = ssub.s32 1, %s5
  %s8 = scalar_select 0, %s7, %s5
  $region1: #{tpu_custom_call.1} parent=0
    #allocation2 [shape = 'u8[4096]{0}', space=vmem, size = 0x1000, scoped, tag = 'output window, operand 0, single buffered']
    #allocation3 [shape = 's32[1]{0}', space=sflag, size = 0x4, scoped, tag = 'scoped memory for tpu_custom_call.1']
    %9 = vsyncpa [#allocation3], 0
    // Predicated region
    $region2: #{tpu_custom_call.1} parent=1 // pred_check
      _
    $region3: #{tpu_custom_call.1} parent=1 // pred_check_branch
      %11 = sbr.rel (0) target = $region5
    $region4: #{tpu_custom_call.1} parent=1 // pred_region
      _
    $region5: #{tpu_custom_call.1} parent=1 // pred_fallthru
      _
    // Predicated region
    $region6: #{tpu_custom_call.1} parent=1 // pred_check
      _
    $region7: #{tpu_custom_call.1} parent=1 // pred_check_branch
      %13 = sbr.rel (0) target = $region9
    $region8: #{tpu_custom_call.1} parent=1 // pred_region
      _
    $region9: #{tpu_custom_call.1} parent=1 // pred_fallthru
      _
    // Predicated region
    $region10: #{tpu_custom_call.1} parent=1 // pred_check
      _
    $region11: #{tpu_custom_call.1} parent=1 // pred_check_branch
      %15 = sbr.rel (0) target = $region13
    $region12: #{tpu_custom_call.1} parent=1 // pred_region
      _
    $region13: #{tpu_custom_call.1} parent=1 // pred_fallthru
      _
    // Predicated region
    $region14: #{tpu_custom_call.1} parent=1 // pred_check
      _
    $region15: #{tpu_custom_call.1} parent=1 // pred_check_branch
      %17 = sbr.rel (0) target = $region17
    $region16: #{tpu_custom_call.1} parent=1 // pred_region
      _
    $region17: #{tpu_custom_call.1} parent=1 // pred_fallthru
      _
    %v18 = vld [vmem:[%s0] sm:$0xff]
    %v19 = vld [vmem:[%s0 + $0x8] sm:$0xff]
    %v20 = vld [vmem:[%s0 + $0x10] sm:$0xf]
    %v21 = vld [vmem:[%s0 + $0x18] sm:$0xff]
    %v22 = vld [vmem:[%s0 + $0x20] sm:$0xff]
    %v23 = vld [vmem:[%s0 + $0x28] sm:$0xf]
    %v24 = vld [vmem:[%s0 + $0x30] sm:$0xff]
    %v25 = vld [vmem:[%s0 + $0x38] sm:$0xff]
    %v26 = vld [vmem:[%s0 + $0x40] sm:$0xf]
    %v27 = vld [vmem:[%s0 + $0x48] sm:$0xff]
    %v28 = vld [vmem:[%s0 + $0x50] sm:$0xff]
    %v29 = vld [vmem:[%s0 + $0x58] sm:$0xf]
    %v30 = vld [vmem:[%s0 + $0x60] sm:$0xff]
    %v31 = vld [vmem:[%s0 + $0x68] sm:$0xff]
    %v32 = vld [vmem:[%s0 + $0x70] sm:$0xf]
    %v33 = vld [vmem:[%s0 + $0x78] sm:$0xff]
    %v34 = vld [vmem:[%s0 + $0x80] sm:$0xff]
    %v35 = vld [vmem:[%s0 + $0x88] sm:$0xf]
    %v36 = vld [vmem:[%s0 + $0x90] sm:$0xff]
    %v37 = vld [vmem:[%s0 + $0x98] sm:$0xff]
    %v38 = vld [vmem:[%s0 + $0xa0] sm:$0xf]
    %v39 = vld [vmem:[%s0 + $0xa8] sm:$0xff]
    %v40 = vld [vmem:[%s0 + $0xb0] sm:$0xff]
    %v41 = vld [vmem:[%s0 + $0xb8] sm:$0xf]
    %v42 = vld [vmem:[%s1] sm:$0xf]
    %v43 = vld [vmem:[%s1 + $0x4] sm:$0xf]
    %v44 = vld [vmem:[%s1 + $0x8] sm:$0xf]
    %v45 = vld [vmem:[%s1 + $0xc] sm:$0xf]
    %v46 = vld [vmem:[%s1 + $0x10] sm:$0xf]
    %vm71 = vcmask 1046528
    %v72 = vrot.slane %v18, 1
    %v73 = vrot.slane %v19, 1
    %v74 = vsel %vm71, %v72, %v73
    %v75 = vrot.slane %v20, 1
    %v76 = vsel %vm71, %v73, %v75
    %v77 = vrot.slane %v21, 1
    %v78 = vrot.slane %v22, 1
    %v79 = vsel %vm71, %v77, %v78
    %v80 = vrot.slane %v23, 1
    %v81 = vsel %vm71, %v78, %v80
    %v82 = vrot.slane %v24, 1
    %v83 = vrot.slane %v25, 1
    %v84 = vsel %vm71, %v82, %v83
    %v85 = vrot.slane %v26, 1
    %v86 = vsel %vm71, %v83, %v85
    %v87 = vrot.slane %v27, 1
    %v88 = vrot.slane %v28, 1
    %v89 = vsel %vm71, %v87, %v88
    %v90 = vrot.slane %v29, 1
    %v91 = vsel %vm71, %v88, %v90
    %v92 = vrot.slane %v30, 1
    %v93 = vrot.slane %v31, 1
    %v94 = vsel %vm71, %v92, %v93
    %v95 = vrot.slane %v32, 1
    %v96 = vsel %vm71, %v93, %v95
    %v97 = vrot.slane %v33, 1
    %v98 = vrot.slane %v34, 1
    %v99 = vsel %vm71, %v97, %v98
    %v100 = vrot.slane %v35, 1
    %v101 = vsel %vm71, %v98, %v100
    %v102 = vrot.slane %v36, 1
    %v103 = vrot.slane %v37, 1
    %v104 = vsel %vm71, %v102, %v103
    %v105 = vrot.slane %v38, 1
    %v106 = vsel %vm71, %v103, %v105
    %v107 = vrot.slane %v39, 1
    %v108 = vrot.slane %v40, 1
    %v109 = vsel %vm71, %v107, %v108
    %v110 = vrot.slane %v41, 1
    %v111 = vsel %vm71, %v108, %v110
    %vm112 = vcmask 31744
    %v113 = vsel %vm112, %v74, 0
    %v115 = vsel %vm112, %v76, 0
    %v117 = vsel %vm112, %v79, 0
    %v119 = vsel %vm112, %v81, 0
    %v121 = vsel %vm112, %v84, 0
    %v123 = vsel %vm112, %v86, 0
    %v125 = vsel %vm112, %v89, 0
    %v127 = vsel %vm112, %v91, 0
    %v129 = vsel %vm112, %v94, 0
    %v131 = vsel %vm112, %v96, 0
    %v133 = vsel %vm112, %v99, 0
    %v135 = vsel %vm112, %v101, 0
    %v137 = vsel %vm112, %v104, 0
    %v139 = vsel %vm112, %v106, 0
    %v141 = vsel %vm112, %v109, 0
    %v143 = vsel %vm112, %v111, 0
    %vm145 = vcmask 1043456
    %v147 = vsel %vm145, %v43, 0
    %149 = vmatpush.msra.mxu0 0.0
    %150 = vmatpush.msra.mxu0 0.0
    %151 = vmatpush.msra.mxu0 0.0
    %152 = vmatpush.msra.mxu0 0.0
    %153 = vmatpush.msra.mxu0 0.0
    %154 = vmatpush.msra.mxu0 0.0
    %155 = vmatpush.msra.mxu0 0.0
    %156 = vmatpush.msra.mxu0 0.0
    %157 = vmatpush.msra.mxu0 0.0
    %158 = vmatpush.msra.mxu0 0.0
    %159 = vmatpush.msra.mxu0 0.0
    %160 = vmatpush.msra.mxu0 0.0
    %161 = vmatpush.msra.mxu0 0.0
    %162 = vmatpush.msra.mxu0 0.0
    %163 = vmatpush.msra.mxu0 0.0
    %164 = vmatpush.msra.mxu0 %v147
    %165 = vmatmul.f32.gmra.mxu0 %v113
    %v166 = vpop.f32.mrf.mxu0
    %v167 = vadd.f32 0.0, %v166
    %168 = vmatmul.f32.gmra.mxu0 %v115
    %v169 = vpop.f32.mrf.mxu0
    %v170 = vadd.f32 0.0, %v169
    %171 = vmatmul.f32.gmra.mxu0 %v117
    %v172 = vpop.f32.mrf.mxu0
    %v173 = vadd.f32 0.0, %v172
    %174 = vmatmul.f32.gmra.mxu0 %v119
    %v175 = vpop.f32.mrf.mxu0
    %v176 = vadd.f32 0.0, %v175
    %177 = vmatmul.f32.gmra.mxu0 %v121
    %v178 = vpop.f32.mrf.mxu0
    %v179 = vadd.f32 0.0, %v178
    %180 = vmatmul.f32.gmra.mxu0 %v123
    %v181 = vpop.f32.mrf.mxu0
    %v182 = vadd.f32 0.0, %v181
    %183 = vmatmul.f32.gmra.mxu0 %v125
    %v184 = vpop.f32.mrf.mxu0
    %v185 = vadd.f32 0.0, %v184
    %186 = vmatmul.f32.gmra.mxu0 %v127
    %v187 = vpop.f32.mrf.mxu0
    %v188 = vadd.f32 0.0, %v187
    %189 = vmatmul.f32.gmra.mxu0 %v129
    %v190 = vpop.f32.mrf.mxu0
    %v191 = vadd.f32 0.0, %v190
    %192 = vmatmul.f32.gmra.mxu0 %v131
    %v193 = vpop.f32.mrf.mxu0
    %v194 = vadd.f32 0.0, %v193
    %195 = vmatmul.f32.gmra.mxu0 %v133
    %v196 = vpop.f32.mrf.mxu0
    %v197 = vadd.f32 0.0, %v196
    %198 = vmatmul.f32.gmra.mxu0 %v135
    %v199 = vpop.f32.mrf.mxu0
    %v200 = vadd.f32 0.0, %v199
    %201 = vmatmul.f32.gmra.mxu0 %v137
    %v202 = vpop.f32.mrf.mxu0
    %v203 = vadd.f32 0.0, %v202
    %204 = vmatmul.f32.gmra.mxu0 %v139
    %v205 = vpop.f32.mrf.mxu0
    %v206 = vadd.f32 0.0, %v205
    %207 = vmatmul.f32.gmra.mxu0 %v141
    %v208 = vpop.f32.mrf.mxu0
    %v209 = vadd.f32 0.0, %v208
    %210 = vmatmul.f32.gmra.mxu0 %v143
    %v211 = vpop.f32.mrf.mxu0
    %v212 = vadd.f32 0.0, %v211
    %213 = vdwg.mxu0
    %v214 = vsel %vm112, %v18, 0
    %v216 = vsel %vm112, %v19, 0
    %v218 = vsel %vm112, %v21, 0
    %v220 = vsel %vm112, %v22, 0
    %v222 = vsel %vm112, %v24, 0
    %v224 = vsel %vm112, %v25, 0
    %v226 = vsel %vm112, %v27, 0
    %v228 = vsel %vm112, %v28, 0
    %v230 = vsel %vm112, %v30, 0
    %v232 = vsel %vm112, %v31, 0
    %v234 = vsel %vm112, %v33, 0
    %v236 = vsel %vm112, %v34, 0
    %v238 = vsel %vm112, %v36, 0
    %v240 = vsel %vm112, %v37, 0
    %v242 = vsel %vm112, %v39, 0
    %v244 = vsel %vm112, %v40, 0
    %v247 = vsel %vm145, %v42, 0
    %249 = vmatpush.msra.mxu0 0.0
    %250 = vmatpush.msra.mxu0 0.0
    %251 = vmatpush.msra.mxu0 0.0
    %252 = vmatpush.msra.mxu0 0.0
    %253 = vmatpush.msra.mxu0 0.0
    %254 = vmatpush.msra.mxu0 0.0
    %255 = vmatpush.msra.mxu0 0.0
    %256 = vmatpush.msra.mxu0 0.0
    %257 = vmatpush.msra.mxu0 0.0
    %258 = vmatpush.msra.mxu0 0.0
    %259 = vmatpush.msra.mxu0 0.0
    %260 = vmatpush.msra.mxu0 0.0
    %261 = vmatpush.msra.mxu0 0.0
    %262 = vmatpush.msra.mxu0 0.0
    %263 = vmatpush.msra.mxu0 0.0
    %264 = vmatpush.msra.mxu0 %v247
    %265 = vmatmul.f32.gmra.mxu0 %v214
    %v266 = vpop.f32.mrf.mxu0
    %v267 = vadd.f32 %v167, %v266
    %268 = vmatmul.f32.gmra.mxu0 %v216
    %v269 = vpop.f32.mrf.mxu0
    %v270 = vadd.f32 %v170, %v269
    %271 = vmatmul.f32.gmra.mxu0 %v218
    %v272 = vpop.f32.mrf.mxu0
    %v273 = vadd.f32 %v173, %v272
    %274 = vmatmul.f32.gmra.mxu0 %v220
    %v275 = vpop.f32.mrf.mxu0
    %v276 = vadd.f32 %v176, %v275
    %277 = vmatmul.f32.gmra.mxu0 %v222
    %v278 = vpop.f32.mrf.mxu0
    %v279 = vadd.f32 %v179, %v278
    %280 = vmatmul.f32.gmra.mxu0 %v224
    %v281 = vpop.f32.mrf.mxu0
    %v282 = vadd.f32 %v182, %v281
    %283 = vmatmul.f32.gmra.mxu0 %v226
    %v284 = vpop.f32.mrf.mxu0
    %v285 = vadd.f32 %v185, %v284
    %286 = vmatmul.f32.gmra.mxu0 %v228
    %v287 = vpop.f32.mrf.mxu0
    %v288 = vadd.f32 %v188, %v287
    %289 = vmatmul.f32.gmra.mxu0 %v230
    %v290 = vpop.f32.mrf.mxu0
    %v291 = vadd.f32 %v191, %v290
    %292 = vmatmul.f32.gmra.mxu0 %v232
    %v293 = vpop.f32.mrf.mxu0
    %v294 = vadd.f32 %v194, %v293
    %295 = vmatmul.f32.gmra.mxu0 %v234
    %v296 = vpop.f32.mrf.mxu0
    %v297 = vadd.f32 %v197, %v296
    %298 = vmatmul.f32.gmra.mxu0 %v236
    %v299 = vpop.f32.mrf.mxu0
    %v300 = vadd.f32 %v200, %v299
    %301 = vmatmul.f32.gmra.mxu0 %v238
    %v302 = vpop.f32.mrf.mxu0
    %v303 = vadd.f32 %v203, %v302
    %304 = vmatmul.f32.gmra.mxu0 %v240
    %v305 = vpop.f32.mrf.mxu0
    %v306 = vadd.f32 %v206, %v305
    %307 = vmatmul.f32.gmra.mxu0 %v242
    %v308 = vpop.f32.mrf.mxu0
    %v309 = vadd.f32 %v209, %v308
    %310 = vmatmul.f32.gmra.mxu0 %v244
    %v311 = vpop.f32.mrf.mxu0
    %v312 = vadd.f32 %v212, %v311
    %313 = vdwg.mxu0
    %vm314 = vcmask 1045504
    %v315 = vrot.slane %v18, 2
    %v316 = vrot.slane %v19, 2
    %v317 = vsel %vm314, %v315, %v316
    %v318 = vrot.slane %v20, 2
    %v319 = vsel %vm314, %v316, %v318
    %v320 = vrot.slane %v21, 2
    %v321 = vrot.slane %v22, 2
    %v322 = vsel %vm314, %v320, %v321
    %v323 = vrot.slane %v23, 2
    %v324 = vsel %vm314, %v321, %v323
    %v325 = vrot.slane %v24, 2
    %v326 = vrot.slane %v25, 2
    %v327 = vsel %vm314, %v325, %v326
    %v328 = vrot.slane %v26, 2
    %v329 = vsel %vm314, %v326, %v328
    %v330 = vrot.slane %v27, 2
    %v331 = vrot.slane %v28, 2
    %v332 = vsel %vm314, %v330, %v331
    %v333 = vrot.slane %v29, 2
    %v334 = vsel %vm314, %v331, %v333
    %v335 = vrot.slane %v30, 2
    %v336 = vrot.slane %v31, 2
    %v337 = vsel %vm314, %v335, %v336
    %v338 = vrot.slane %v32, 2
    %v339 = vsel %vm314, %v336, %v338
    %v340 = vrot.slane %v33, 2
    %v341 = vrot.slane %v34, 2
    %v342 = vsel %vm314, %v340, %v341
    %v343 = vrot.slane %v35, 2
    %v344 = vsel %vm314, %v341, %v343
    %v345 = vrot.slane %v36, 2
    %v346 = vrot.slane %v37, 2
    %v347 = vsel %vm314, %v345, %v346
    %v348 = vrot.slane %v38, 2
    %v349 = vsel %vm314, %v346, %v348
    %v350 = vrot.slane %v39, 2
    %v351 = vrot.slane %v40, 2
    %v352 = vsel %vm314, %v350, %v351
    %v353 = vrot.slane %v41, 2
    %v354 = vsel %vm314, %v351, %v353
    %v355 = vsel %vm112, %v317, 0
    %v357 = vsel %vm112, %v319, 0
    %v359 = vsel %vm112, %v322, 0
    %v361 = vsel %vm112, %v324, 0
    %v363 = vsel %vm112, %v327, 0
    %v365 = vsel %vm112, %v329, 0
    %v367 = vsel %vm112, %v332, 0
    %v369 = vsel %vm112, %v334, 0
    %v371 = vsel %vm112, %v337, 0
    %v373 = vsel %vm112, %v339, 0
    %v375 = vsel %vm112, %v342, 0
    %v377 = vsel %vm112, %v344, 0
    %v379 = vsel %vm112, %v347, 0
    %v381 = vsel %vm112, %v349, 0
    %v383 = vsel %vm112, %v352, 0
    %v385 = vsel %vm112, %v354, 0
    %v388 = vsel %vm145, %v44, 0
    %390 = vmatpush.msra.mxu0 0.0
    %391 = vmatpush.msra.mxu0 0.0
    %392 = vmatpush.msra.mxu0 0.0
    %393 = vmatpush.msra.mxu0 0.0
    %394 = vmatpush.msra.mxu0 0.0
    %395 = vmatpush.msra.mxu0 0.0
    %396 = vmatpush.msra.mxu0 0.0
    %397 = vmatpush.msra.mxu0 0.0
    %398 = vmatpush.msra.mxu0 0.0
    %399 = vmatpush.msra.mxu0 0.0
    %400 = vmatpush.msra.mxu0 0.0
    %401 = vmatpush.msra.mxu0 0.0
    %402 = vmatpush.msra.mxu0 0.0
    %403 = vmatpush.msra.mxu0 0.0
    %404 = vmatpush.msra.mxu0 0.0
    %405 = vmatpush.msra.mxu0 %v388
    %406 = vmatmul.f32.gmra.mxu0 %v355
    %v407 = vpop.f32.mrf.mxu0
    %v408 = vadd.f32 0.0, %v407
    %409 = vmatmul.f32.gmra.mxu0 %v357
    %v410 = vpop.f32.mrf.mxu0
    %v411 = vadd.f32 0.0, %v410
    %412 = vmatmul.f32.gmra.mxu0 %v359
    %v413 = vpop.f32.mrf.mxu0
    %v414 = vadd.f32 0.0, %v413
    %415 = vmatmul.f32.gmra.mxu0 %v361
    %v416 = vpop.f32.mrf.mxu0
    %v417 = vadd.f32 0.0, %v416
    %418 = vmatmul.f32.gmra.mxu0 %v363
    %v419 = vpop.f32.mrf.mxu0
    %v420 = vadd.f32 0.0, %v419
    %421 = vmatmul.f32.gmra.mxu0 %v365
    %v422 = vpop.f32.mrf.mxu0
    %v423 = vadd.f32 0.0, %v422
    %424 = vmatmul.f32.gmra.mxu0 %v367
    %v425 = vpop.f32.mrf.mxu0
    %v426 = vadd.f32 0.0, %v425
    %427 = vmatmul.f32.gmra.mxu0 %v369
    %v428 = vpop.f32.mrf.mxu0
    %v429 = vadd.f32 0.0, %v428
    %430 = vmatmul.f32.gmra.mxu0 %v371
    %v431 = vpop.f32.mrf.mxu0
    %v432 = vadd.f32 0.0, %v431
    %433 = vmatmul.f32.gmra.mxu0 %v373
    %v434 = vpop.f32.mrf.mxu0
    %v435 = vadd.f32 0.0, %v434
    %436 = vmatmul.f32.gmra.mxu0 %v375
    %v437 = vpop.f32.mrf.mxu0
    %v438 = vadd.f32 0.0, %v437
    %439 = vmatmul.f32.gmra.mxu0 %v377
    %v440 = vpop.f32.mrf.mxu0
    %v441 = vadd.f32 0.0, %v440
    %442 = vmatmul.f32.gmra.mxu0 %v379
    %v443 = vpop.f32.mrf.mxu0
    %v444 = vadd.f32 0.0, %v443
    %445 = vmatmul.f32.gmra.mxu0 %v381
    %v446 = vpop.f32.mrf.mxu0
    %v447 = vadd.f32 0.0, %v446
    %448 = vmatmul.f32.gmra.mxu0 %v383
    %v449 = vpop.f32.mrf.mxu0
    %v450 = vadd.f32 0.0, %v449
    %451 = vmatmul.f32.gmra.mxu0 %v385
    %v452 = vpop.f32.mrf.mxu0
    %v453 = vadd.f32 0.0, %v452
    %454 = vdwg.mxu0
    %v455 = vadd.f32 %v267, %v408
    %v456 = vadd.f32 %v270, %v411
    %v457 = vadd.f32 %v273, %v414
    %v458 = vadd.f32 %v276, %v417
    %v459 = vadd.f32 %v279, %v420
    %v460 = vadd.f32 %v282, %v423
    %v461 = vadd.f32 %v285, %v426
    %v462 = vadd.f32 %v288, %v429
    %v463 = vadd.f32 %v291, %v432
    %v464 = vadd.f32 %v294, %v435
    %v465 = vadd.f32 %v297, %v438
    %v466 = vadd.f32 %v300, %v441
    %v467 = vadd.f32 %v303, %v444
    %v468 = vadd.f32 %v306, %v447
    %v469 = vadd.f32 %v309, %v450
    %v470 = vadd.f32 %v312, %v453
    %vm471 = vcmask 1044480
    %v472 = vrot.slane %v18, 3
    %v473 = vrot.slane %v19, 3
    %v474 = vsel %vm471, %v472, %v473
    %v475 = vrot.slane %v20, 3
    %v476 = vsel %vm471, %v473, %v475
    %v477 = vrot.slane %v21, 3
    %v478 = vrot.slane %v22, 3
    %v479 = vsel %vm471, %v477, %v478
    %v480 = vrot.slane %v23, 3
    %v481 = vsel %vm471, %v478, %v480
    %v482 = vrot.slane %v24, 3
    %v483 = vrot.slane %v25, 3
    %v484 = vsel %vm471, %v482, %v483
    %v485 = vrot.slane %v26, 3
    %v486 = vsel %vm471, %v483, %v485
    %v487 = vrot.slane %v27, 3
    %v488 = vrot.slane %v28, 3
    %v489 = vsel %vm471, %v487, %v488
    %v490 = vrot.slane %v29, 3
    %v491 = vsel %vm471, %v488, %v490
    %v492 = vrot.slane %v30, 3
    %v493 = vrot.slane %v31, 3
    %v494 = vsel %vm471, %v492, %v493
    %v495 = vrot.slane %v32, 3
    %v496 = vsel %vm471, %v493, %v495
    %v497 = vrot.slane %v33, 3
    %v498 = vrot.slane %v34, 3
    %v499 = vsel %vm471, %v497, %v498
    %v500 = vrot.slane %v35, 3
    %v501 = vsel %vm471, %v498, %v500
    %v502 = vrot.slane %v36, 3
    %v503 = vrot.slane %v37, 3
    %v504 = vsel %vm471, %v502, %v503
    %v505 = vrot.slane %v38, 3
    %v506 = vsel %vm471, %v503, %v505
    %v507 = vrot.slane %v39, 3
    %v508 = vrot.slane %v40, 3
    %v509 = vsel %vm471, %v507, %v508
    %v510 = vrot.slane %v41, 3
    %v511 = vsel %vm471, %v508, %v510
    %v512 = vsel %vm112, %v474, 0
    %v514 = vsel %vm112, %v476, 0
    %v516 = vsel %vm112, %v479, 0
    %v518 = vsel %vm112, %v481, 0
    %v520 = vsel %vm112, %v484, 0
    %v522 = vsel %vm112, %v486, 0
    %v524 = vsel %vm112, %v489, 0
    %v526 = vsel %vm112, %v491, 0
    %v528 = vsel %vm112, %v494, 0
    %v530 = vsel %vm112, %v496, 0
    %v532 = vsel %vm112, %v499, 0
    %v534 = vsel %vm112, %v501, 0
    %v536 = vsel %vm112, %v504, 0
    %v538 = vsel %vm112, %v506, 0
    %v540 = vsel %vm112, %v509, 0
    %v542 = vsel %vm112, %v511, 0
    %v545 = vsel %vm145, %v45, 0
    %547 = vmatpush.msra.mxu0 0.0
    %548 = vmatpush.msra.mxu0 0.0
    %549 = vmatpush.msra.mxu0 0.0
    %550 = vmatpush.msra.mxu0 0.0
    %551 = vmatpush.msra.mxu0 0.0
    %552 = vmatpush.msra.mxu0 0.0
    %553 = vmatpush.msra.mxu0 0.0
    %554 = vmatpush.msra.mxu0 0.0
    %555 = vmatpush.msra.mxu0 0.0
    %556 = vmatpush.msra.mxu0 0.0
    %557 = vmatpush.msra.mxu0 0.0
    %558 = vmatpush.msra.mxu0 0.0
    %559 = vmatpush.msra.mxu0 0.0
    %560 = vmatpush.msra.mxu0 0.0
    %561 = vmatpush.msra.mxu0 0.0
    %562 = vmatpush.msra.mxu0 %v545
    %563 = vmatmul.f32.gmra.mxu0 %v512
    %v564 = vpop.f32.mrf.mxu0
    %v565 = vadd.f32 0.0, %v564
    %566 = vmatmul.f32.gmra.mxu0 %v514
    %v567 = vpop.f32.mrf.mxu0
    %v568 = vadd.f32 0.0, %v567
    %569 = vmatmul.f32.gmra.mxu0 %v516
    %v570 = vpop.f32.mrf.mxu0
    %v571 = vadd.f32 0.0, %v570
    %572 = vmatmul.f32.gmra.mxu0 %v518
    %v573 = vpop.f32.mrf.mxu0
    %v574 = vadd.f32 0.0, %v573
    %575 = vmatmul.f32.gmra.mxu0 %v520
    %v576 = vpop.f32.mrf.mxu0
    %v577 = vadd.f32 0.0, %v576
    %578 = vmatmul.f32.gmra.mxu0 %v522
    %v579 = vpop.f32.mrf.mxu0
    %v580 = vadd.f32 0.0, %v579
    %581 = vmatmul.f32.gmra.mxu0 %v524
    %v582 = vpop.f32.mrf.mxu0
    %v583 = vadd.f32 0.0, %v582
    %584 = vmatmul.f32.gmra.mxu0 %v526
    %v585 = vpop.f32.mrf.mxu0
    %v586 = vadd.f32 0.0, %v585
    %587 = vmatmul.f32.gmra.mxu0 %v528
    %v588 = vpop.f32.mrf.mxu0
    %v589 = vadd.f32 0.0, %v588
    %590 = vmatmul.f32.gmra.mxu0 %v530
    %v591 = vpop.f32.mrf.mxu0
    %v592 = vadd.f32 0.0, %v591
    %593 = vmatmul.f32.gmra.mxu0 %v532
    %v594 = vpop.f32.mrf.mxu0
    %v595 = vadd.f32 0.0, %v594
    %596 = vmatmul.f32.gmra.mxu0 %v534
    %v597 = vpop.f32.mrf.mxu0
    %v598 = vadd.f32 0.0, %v597
    %599 = vmatmul.f32.gmra.mxu0 %v536
    %v600 = vpop.f32.mrf.mxu0
    %v601 = vadd.f32 0.0, %v600
    %602 = vmatmul.f32.gmra.mxu0 %v538
    %v603 = vpop.f32.mrf.mxu0
    %v604 = vadd.f32 0.0, %v603
    %605 = vmatmul.f32.gmra.mxu0 %v540
    %v606 = vpop.f32.mrf.mxu0
    %v607 = vadd.f32 0.0, %v606
    %608 = vmatmul.f32.gmra.mxu0 %v542
    %v609 = vpop.f32.mrf.mxu0
    %v610 = vadd.f32 0.0, %v609
    %611 = vdwg.mxu0
    %v612 = vadd.f32 %v455, %v565
    %v613 = vadd.f32 %v456, %v568
    %v614 = vadd.f32 %v457, %v571
    %v615 = vadd.f32 %v458, %v574
    %v616 = vadd.f32 %v459, %v577
    %v617 = vadd.f32 %v460, %v580
    %v618 = vadd.f32 %v461, %v583
    %v619 = vadd.f32 %v462, %v586
    %v620 = vadd.f32 %v463, %v589
    %v621 = vadd.f32 %v464, %v592
    %v622 = vadd.f32 %v465, %v595
    %v623 = vadd.f32 %v466, %v598
    %v624 = vadd.f32 %v467, %v601
    %v625 = vadd.f32 %v468, %v604
    %v626 = vadd.f32 %v469, %v607
    %v627 = vadd.f32 %v470, %v610
    %v628 = vrot.slane %v18, 4
    %v629 = vrot.slane %v19, 4
    %v630 = vsel %vm145, %v628, %v629
    %v631 = vrot.slane %v20, 4
    %v632 = vsel %vm145, %v629, %v631
    %v633 = vrot.slane %v21, 4
    %v634 = vrot.slane %v22, 4
    %v635 = vsel %vm145, %v633, %v634
    %v636 = vrot.slane %v23, 4
    %v637 = vsel %vm145, %v634, %v636
    %v638 = vrot.slane %v24, 4
    %v639 = vrot.slane %v25, 4
    %v640 = vsel %vm145, %v638, %v639
    %v641 = vrot.slane %v26, 4
    %v642 = vsel %vm145, %v639, %v641
    %v643 = vrot.slane %v27, 4
    %v644 = vrot.slane %v28, 4
    %v645 = vsel %vm145, %v643, %v644
    %v646 = vrot.slane %v29, 4
    %v647 = vsel %vm145, %v644, %v646
    %v648 = vrot.slane %v30, 4
    %v649 = vrot.slane %v31, 4
    %v650 = vsel %vm145, %v648, %v649
    %v651 = vrot.slane %v32, 4
    %v652 = vsel %vm145, %v649, %v651
    %v653 = vrot.slane %v33, 4
    %v654 = vrot.slane %v34, 4
    %v655 = vsel %vm145, %v653, %v654
    %v656 = vrot.slane %v35, 4
    %v657 = vsel %vm145, %v654, %v656
    %v658 = vrot.slane %v36, 4
    %v659 = vrot.slane %v37, 4
    %v660 = vsel %vm145, %v658, %v659
    %v661 = vrot.slane %v38, 4
    %v662 = vsel %vm145, %v659, %v661
    %v663 = vrot.slane %v39, 4
    %v664 = vrot.slane %v40, 4
    %v665 = vsel %vm145, %v663, %v664
    %v666 = vrot.slane %v41, 4
    %v667 = vsel %vm145, %v664, %v666
    %v668 = vsel %vm112, %v630, 0
    %v670 = vsel %vm112, %v632, 0
    %v672 = vsel %vm112, %v635, 0
    %v674 = vsel %vm112, %v637, 0
    %v676 = vsel %vm112, %v640, 0
    %v678 = vsel %vm112, %v642, 0
    %v680 = vsel %vm112, %v645, 0
    %v682 = vsel %vm112, %v647, 0
    %v684 = vsel %vm112, %v650, 0
    %v686 = vsel %vm112, %v652, 0
    %v688 = vsel %vm112, %v655, 0
    %v690 = vsel %vm112, %v657, 0
    %v692 = vsel %vm112, %v660, 0
    %v694 = vsel %vm112, %v662, 0
    %v696 = vsel %vm112, %v665, 0
    %v698 = vsel %vm112, %v667, 0
    %v701 = vsel %vm145, %v46, 0
    %703 = vmatpush.msra.mxu0 0.0
    %704 = vmatpush.msra.mxu0 0.0
    %705 = vmatpush.msra.mxu0 0.0
    %706 = vmatpush.msra.mxu0 0.0
    %707 = vmatpush.msra.mxu0 0.0
    %708 = vmatpush.msra.mxu0 0.0
    %709 = vmatpush.msra.mxu0 0.0
    %710 = vmatpush.msra.mxu0 0.0
    %711 = vmatpush.msra.mxu0 0.0
    %712 = vmatpush.msra.mxu0 0.0
    %713 = vmatpush.msra.mxu0 0.0
    %714 = vmatpush.msra.mxu0 0.0
    %715 = vmatpush.msra.mxu0 0.0
    %716 = vmatpush.msra.mxu0 0.0
    %717 = vmatpush.msra.mxu0 0.0
    %718 = vmatpush.msra.mxu0 %v701
    %719 = vmatmul.f32.gmra.mxu0 %v668
    %v720 = vpop.f32.mrf.mxu0
    %v721 = vadd.f32 0.0, %v720
    %722 = vmatmul.f32.gmra.mxu0 %v670
    %v723 = vpop.f32.mrf.mxu0
    %v724 = vadd.f32 0.0, %v723
    %725 = vmatmul.f32.gmra.mxu0 %v672
    %v726 = vpop.f32.mrf.mxu0
    %v727 = vadd.f32 0.0, %v726
    %728 = vmatmul.f32.gmra.mxu0 %v674
    %v729 = vpop.f32.mrf.mxu0
    %v730 = vadd.f32 0.0, %v729
    %731 = vmatmul.f32.gmra.mxu0 %v676
    %v732 = vpop.f32.mrf.mxu0
    %v733 = vadd.f32 0.0, %v732
    %734 = vmatmul.f32.gmra.mxu0 %v678
    %v735 = vpop.f32.mrf.mxu0
    %v736 = vadd.f32 0.0, %v735
    %737 = vmatmul.f32.gmra.mxu0 %v680
    %v738 = vpop.f32.mrf.mxu0
    %v739 = vadd.f32 0.0, %v738
    %740 = vmatmul.f32.gmra.mxu0 %v682
    %v741 = vpop.f32.mrf.mxu0
    %v742 = vadd.f32 0.0, %v741
    %743 = vmatmul.f32.gmra.mxu0 %v684
    %v744 = vpop.f32.mrf.mxu0
    %v745 = vadd.f32 0.0, %v744
    %746 = vmatmul.f32.gmra.mxu0 %v686
    %v747 = vpop.f32.mrf.mxu0
    %v748 = vadd.f32 0.0, %v747
    %749 = vmatmul.f32.gmra.mxu0 %v688
    %v750 = vpop.f32.mrf.mxu0
    %v751 = vadd.f32 0.0, %v750
    %752 = vmatmul.f32.gmra.mxu0 %v690
    %v753 = vpop.f32.mrf.mxu0
    %v754 = vadd.f32 0.0, %v753
    %755 = vmatmul.f32.gmra.mxu0 %v692
    %v756 = vpop.f32.mrf.mxu0
    %v757 = vadd.f32 0.0, %v756
    %758 = vmatmul.f32.gmra.mxu0 %v694
    %v759 = vpop.f32.mrf.mxu0
    %v760 = vadd.f32 0.0, %v759
    %761 = vmatmul.f32.gmra.mxu0 %v696
    %v762 = vpop.f32.mrf.mxu0
    %v763 = vadd.f32 0.0, %v762
    %764 = vmatmul.f32.gmra.mxu0 %v698
    %v765 = vpop.f32.mrf.mxu0
    %v766 = vadd.f32 0.0, %v765
    %767 = vdwg.mxu0
    %v768 = vadd.f32 %v612, %v721
    %v769 = vadd.f32 %v613, %v724
    %v770 = vadd.f32 %v614, %v727
    %v771 = vadd.f32 %v615, %v730
    %v772 = vadd.f32 %v616, %v733
    %v773 = vadd.f32 %v617, %v736
    %v774 = vadd.f32 %v618, %v739
    %v775 = vadd.f32 %v619, %v742
    %v776 = vadd.f32 %v620, %v745
    %v777 = vadd.f32 %v621, %v748
    %v778 = vadd.f32 %v622, %v751
    %v779 = vadd.f32 %v623, %v754
    %v780 = vadd.f32 %v624, %v757
    %v781 = vadd.f32 %v625, %v760
    %v782 = vadd.f32 %v626, %v763
    %v783 = vadd.f32 %v627, %v766
    %v784 = vld [vmem:[%s3] sm:$0xff]
    %v785 = vld [vmem:[%s3 + $0x8] sm:$0xff]
    %v786 = vadd.f32 %v768, %v784
    %v787 = vadd.f32 %v769, %v785
    %v788 = vadd.f32 %v770, %v784
    %v789 = vadd.f32 %v771, %v785
    %v790 = vadd.f32 %v772, %v784
    %v791 = vadd.f32 %v773, %v785
    %v792 = vadd.f32 %v774, %v784
    %v793 = vadd.f32 %v775, %v785
    %v794 = vadd.f32 %v776, %v784
    %v795 = vadd.f32 %v777, %v785
    %v796 = vadd.f32 %v778, %v784
    %v797 = vadd.f32 %v779, %v785
    %v798 = vadd.f32 %v780, %v784
    %v799 = vadd.f32 %v781, %v785
    %v800 = vadd.f32 %v782, %v784
    %v801 = vadd.f32 %v783, %v785
    %v802 = vmax.f32 %v786, %v787
    %v803 = vrot.slane %v802, 4
    %v804 = vmax.f32 %v802, %v803
    %v805 = vrot.slane %v804, 2
    %v806 = vmax.f32 %v804, %v805
    %v807 = vrot.slane %v806, 1
    %v808 = vmax.f32 %v806, %v807
    %v809 = vmax.f32 %v788, %v789
    %v810 = vrot.slane %v809, 4
    %v811 = vmax.f32 %v809, %v810
    %v812 = vrot.slane %v811, 2
    %v813 = vmax.f32 %v811, %v812
    %v814 = vrot.slane %v813, 1
    %v815 = vmax.f32 %v813, %v814
    %v816 = vmax.f32 %v790, %v791
    %v817 = vrot.slane %v816, 4
    %v818 = vmax.f32 %v816, %v817
    %v819 = vrot.slane %v818, 2
    %v820 = vmax.f32 %v818, %v819
    %v821 = vrot.slane %v820, 1
    %v822 = vmax.f32 %v820, %v821
    %v823 = vmax.f32 %v792, %v793
    %v824 = vrot.slane %v823, 4
    %v825 = vmax.f32 %v823, %v824
    %v826 = vrot.slane %v825, 2
    %v827 = vmax.f32 %v825, %v826
    %v828 = vrot.slane %v827, 1
    %v829 = vmax.f32 %v827, %v828
    %v830 = vmax.f32 %v794, %v795
    %v831 = vrot.slane %v830, 4
    %v832 = vmax.f32 %v830, %v831
    %v833 = vrot.slane %v832, 2
    %v834 = vmax.f32 %v832, %v833
    %v835 = vrot.slane %v834, 1
    %v836 = vmax.f32 %v834, %v835
    %v837 = vmax.f32 %v796, %v797
    %v838 = vrot.slane %v837, 4
    %v839 = vmax.f32 %v837, %v838
    %v840 = vrot.slane %v839, 2
    %v841 = vmax.f32 %v839, %v840
    %v842 = vrot.slane %v841, 1
    %v843 = vmax.f32 %v841, %v842
    %v844 = vmax.f32 %v798, %v799
    %v845 = vrot.slane %v844, 4
    %v846 = vmax.f32 %v844, %v845
    %v847 = vrot.slane %v846, 2
    %v848 = vmax.f32 %v846, %v847
    %v849 = vrot.slane %v848, 1
    %v850 = vmax.f32 %v848, %v849
    %v851 = vmax.f32 %v800, %v801
    %v852 = vrot.slane %v851, 4
    %v853 = vmax.f32 %v851, %v852
    %v854 = vrot.slane %v853, 2
    %v855 = vmax.f32 %v853, %v854
    %v856 = vrot.slane %v855, 1
    %v857 = vmax.f32 %v855, %v856
    %v858 = vld [vmem:[%s2] sm:$0x1]
    %v860 = vperm.slane %v858, 0
    %v862 = vadd.f32 %v808, %v860
    %v863 = vadd.f32 %v815, %v860
    %v864 = vadd.f32 %v822, %v860
    %v865 = vadd.f32 %v829, %v860
    %v866 = vadd.f32 %v836, %v860
    %v867 = vadd.f32 %v843, %v860
    %v868 = vadd.f32 %v850, %v860
    %v869 = vadd.f32 %v857, %v860
    %v878 = vrot.slane %v863, 7
    %vm879 = vcmask 1041409
    %v880 = vsel %vm879, %v878, %v862
    %v881 = vrot.slane %v864, 6
    %vm882 = vcmask 1042434
    %v883 = vsel %vm882, %v881, %v880
    %v884 = vrot.slane %v865, 5
    %vm885 = vcmask 1043459
    %v886 = vsel %vm885, %v884, %v883
    %v887 = vrot.slane %v866, 4
    %vm888 = vcmask 1044484
    %v889 = vsel %vm888, %v887, %v886
    %v890 = vrot.slane %v867, 3
    %vm891 = vcmask 1045509
    %v892 = vsel %vm891, %v890, %v889
    %v893 = vrot.slane %v868, 2
    %vm894 = vcmask 1046534
    %v895 = vsel %vm894, %v893, %v892
    %v896 = vrot.slane %v869, 1
    %vm897 = vcmask 1047559
    %v898 = vsel %vm897, %v896, %v895
    %900 = vst [vmem:[#allocation2] sm:$0xff] %v898
    // Predicated region
    $region18: #{tpu_custom_call.1} parent=1 // pred_check
      _
    $region19: #{tpu_custom_call.1} parent=1 // pred_check_branch
      %902 = sbr.rel (0) target = $region21
    $region20: #{tpu_custom_call.1} parent=1 // pred_region
      %904 = vsyncadd [#allocation3], 0
      %s906 = sshll.u32 [#allocation2], 4
      %s907 = int_to_ptr.vmem [resolvable:$true] %s906
      %s908 = sshll.u32 %s4, 4
      %s909 = int_to_ptr.hbm [resolvable:$true] %s908
      %911 = dma.vmem_to_hbm [thread:$0]  %s907, 128, %s909, [#allocation3]
    $region21: #{tpu_custom_call.1} parent=1 // pred_fallthru
      _
    // Predicated region
    $region22: #{tpu_custom_call.1} parent=1 // pred_check
      _
    $region23: #{tpu_custom_call.1} parent=1 // pred_check_branch
      %913 = sbr.rel (0) target = $region25
    $region24: #{tpu_custom_call.1} parent=1 // pred_region
      %915 = dma.done [#allocation3], 128
    $region25: #{tpu_custom_call.1} parent=1 // pred_fallthru
      _
    %916 = vsyncpa [#allocation3], 1

</llo_original>
